<compile_context>
chip_gen: v5e
topology: v5e:2x2
jax: 0.10.0
libtpu: 0.0.40
codegen_flags: <defaults>
</compile_context>

<pallas_src>
import functools

import jax
import jax.numpy as jnp
from jax import lax
from jax.experimental import pallas as pl
from jax.experimental.pallas import tpu as pltpu


def _l2_normalize(x):
    # F.normalize(p=2, dim=-1): x / max(||x||_2, 1e-12)
    nrm = jnp.sqrt(jnp.sum(x * x, axis=-1, keepdims=True))
    return x / jnp.maximum(nrm, 1e-12)


def _pt_map_kernel(x_ref, lab_oh_t_ref, pos_oh_t_ref, qlab_ref, logp_ref, acc_ref, *,
                   num_way, num_shot, num_query, lam, alpha, n_epochs, train_mode):
    W = num_way
    n_l = W * num_shot
    n_u = W * num_query
    N = n_l + n_u
    f32 = jnp.float32
    dotg = functools.partial(lax.dot_general, preferred_element_type=f32)

    X = x_ref[...].astype(f32)                 # (N, D), non-negative features
    # X = torch.pow(X + 1e-6, 0.5)
    X = jnp.sqrt(X + 1e-6)

    # scale()
    if not train_mode:
        X = _l2_normalize(X)
        # centerDatas: center labeled and unlabeled rows separately.
        row = lax.broadcasted_iota(jnp.int32, (N, 1), 0)
        is_l = row < n_l
        mean_l = jnp.sum(jnp.where(is_l, X, 0.0), axis=0, keepdims=True) * (1.0 / n_l)
        mean_u = jnp.sum(jnp.where(is_l, 0.0, X), axis=0, keepdims=True) * (1.0 / n_u)
        X = X - jnp.where(is_l, mean_l, mean_u)
    Z = _l2_normalize(X)                       # (N, D)

    Z_l = Z[:n_l, :]                           # (n_l, D)
    Z_u = Z[n_l:, :]                           # (n_u, D)
    Zt_u = jnp.transpose(Z_u)                  # (D, n_u), transposed once, reused every call

    # ---- epoch-invariant terms (hoisted out of all loops) ----
    lab_oh_t = lab_oh_t_ref[...]                                               # (W, n_l)
    pos_oh_t = pos_oh_t_ref[...]                                               # (W, n_l)
    # squared norms of the query rows, lane-dense (1, n_u)
    zz = jnp.sum(Zt_u * Zt_u, axis=0, keepdims=True)                           # (1, n_u)
    # labeled part of mask^T @ Z and of mask.sum(0)
    lab_sum = dotg(lab_oh_t, Z_l, (((1,), (0,)), ((), ())))                    # (W, D)
    lab_counts = jnp.sum(lab_oh_t, axis=1, keepdims=True)                      # (W, 1)
    # GaussianModel.init_from_labelled: per-class mean of support rows (positional layout)
    mus0 = dotg(pos_oh_t, Z_l, (((1,), (0,)), ((), ()))) * (1.0 / num_shot)    # (W, D)

    eps = 1e-6
    maxiters = 1000

    def sinkhorn_query_probs(mus):
        """Optimal-transport probabilities for the query rows, lane-dense (W, n_u)."""
        mm = jnp.sum(mus * mus, axis=-1, keepdims=True)                        # (W, 1)
        cross = dotg(mus, Zt_u, (((1,), (0,)), ((), ())))                      # (W, n_u)
        M = (zz + mm) - 2.0 * cross                                            # ||z_u - mu||^2

        P0 = jnp.exp(-lam * M)
        P0 = P0 / jnp.sum(P0)                                                  # global normalize
        u0 = jnp.zeros((1, n_u), f32)
        rs0 = jnp.sum(P0, axis=0, keepdims=True)                               # per-query class-sum

        def cond(carry):
            _, u, rs, it = carry
            return jnp.logical_and(it < maxiters,
                                   jnp.max(jnp.abs(u - rs)) > eps)

        def body(carry):
            P, _, rs, it = carry
            # r = 1 per query (scale query columns), c = num_query per class (rows).
            P1 = P * pl.reciprocal(rs, approx=True)
            cs = jnp.sum(P1, axis=1, keepdims=True)                            # (W, 1)
            P2 = P1 * (float(num_query) * pl.reciprocal(cs, approx=True))
            rs2 = jnp.sum(P2, axis=0, keepdims=True)                           # (1, n_u)
            return (P2, rs, rs2, it + 1)

        P, _, _, _ = lax.while_loop(cond, body, (P0, u0, rs0, jnp.int32(0)))
        return P                                                               # (W, n_u)

    def epoch_body(_, mus):
        Pq = sinkhorn_query_probs(mus)
        # mask = [one_hot(support labels) ; Pq^T];  emus = mask^T @ Z / mask.sum(0)
        num = lab_sum + dotg(Pq, Z_u, (((1,), (0,)), ((), ())))                # (W, D)
        counts = lab_counts + jnp.sum(Pq, axis=1, keepdims=True)               # (W, 1)
        emus = num / counts                                                    # exact; runs n_epochs times only
        return mus + alpha * (emus - mus)

    mus = lax.fori_loop(0, n_epochs, epoch_body, mus0)

    # Final probabilities over the query set (lane-dense (W, n_u); transposed in wrapper)
    Pq = sinkhorn_query_probs(mus)
    logp_ref[...] = jnp.log(Pq + 1e-6).astype(logp_ref.dtype)

    # accuracy: argmax over classes (first maximal index) vs. query labels
    maxv = jnp.max(Pq, axis=0, keepdims=True)                                  # (1, n_u)
    idx = lax.broadcasted_iota(jnp.int32, (W, n_u), 0)
    cand = jnp.where(Pq >= maxv, idx, W)
    yhat = jnp.min(cand, axis=0, keepdims=True)                                # (1, n_u)
    matches = (yhat == qlab_ref[...]).astype(f32)                              # (1, n_u)
    acc_ref[0, 0] = jnp.mean(matches)


def pt_map_loss_forward(X, labels, *, mode, num_way, num_shot, num_query,
                        lam=10.0, alpha=0.2, n_epochs=10):
    """Returns (log(P_query + 1e-6)  [n_usamples, num_way],  accuracy scalar)."""
    N, _ = X.shape
    n_l = num_way * num_shot
    n_u = num_way * num_query
    assert N == n_l + n_u, "X rows must equal num_way*(num_shot+num_query)"
    # TODO(synk): the reference's `assert X.min() >= 0` (host sync, jit-unfriendly) is
    # intentionally dropped; PT-MAP still requires non-negative features upstream.

    X = X.astype(jnp.float32)
    labels = labels.astype(jnp.int32)
    # support-label one-hot, passed transposed (W, n_l) so the kernel never re-lays it out
    lab_oh_t = jnp.transpose(jax.nn.one_hot(labels[:n_l], num_way, dtype=jnp.float32))
    # positional one-hot (row s*W + w -> class w) for GaussianModel.init_from_labelled
    pos_oh_t = jnp.tile(jnp.eye(num_way, dtype=jnp.float32), (1, num_shot))    # (W, n_l)
    qlab = labels[n_l:].reshape(1, n_u)                                        # (1, n_u)

    kernel = functools.partial(
        _pt_map_kernel,
        num_way=num_way, num_shot=num_shot, num_query=num_query,
        lam=float(lam), alpha=float(alpha), n_epochs=int(n_epochs),
        train_mode=(mode == "train"))

    logp_wq, acc = pl.pallas_call(
        kernel,
        out_shape=(jax.ShapeDtypeStruct((num_way, n_u), jnp.float32),
                   jax.ShapeDtypeStruct((1, 1), jnp.float32)),
        in_specs=[pl.BlockSpec(memory_space=pltpu.MemorySpace.VMEM)] * 4,
        out_specs=(pl.BlockSpec(memory_space=pltpu.MemorySpace.VMEM),
                   pl.BlockSpec(memory_space=pltpu.MemorySpace.SMEM)),
    )(X, lab_oh_t, pos_oh_t, qlab)
    # kernel emits logp lane-dense as (W, n_u); present it as (n_u, W) like the reference
    return jnp.transpose(logp_wq), acc[0, 0]


if __name__ == "__main__":
    # Small synthetic episode: 4-way, 1-shot, 3-query, 64-dim features.
    num_way, num_shot, num_query, D = 4, 1, 3, 64
    N = num_way * (num_shot + num_query)

    key = jax.random.PRNGKey(0)
    # Non-negative features, as PT-MAP requires.
    X = jax.random.uniform(key, (N, D), dtype=jnp.float32, minval=0.0, maxval=1.0)
    # Row s*num_way + w belongs to class w (PT-MAP episode layout).
    labels = jnp.tile(jnp.arange(num_way, dtype=jnp.int32), num_shot + num_query)

    fwd = jax.jit(functools.partial(
        pt_map_loss_forward, mode="val",
        num_way=num_way, num_shot=num_shot, num_query=num_query,
        lam=10.0, alpha=0.2, n_epochs=10))
    logp, acc = fwd(X, labels)

    jax.block_until_ready((logp, acc))
    print("KERNEL_OK")
</pallas_src>

<mosaic_0001>
module attributes {stable_mosaic.version = 11 : i64} {
  func.func @_pt_map_kernel(%arg0: memref<16x64xf32, #tpu.memory_space<vmem>>, %arg1: memref<4x4xf32, #tpu.memory_space<vmem>>, %arg2: memref<4x4xf32, #tpu.memory_space<vmem>>, %arg3: memref<1x12xi32, #tpu.memory_space<vmem>>, %arg4: memref<4x12xf32, #tpu.memory_space<vmem>>, %arg5: memref<1x1xf32, #tpu.memory_space<smem>>) attributes {dimension_semantics = [], scalar_prefetch = 0 : i64, scratch_operands = 0 : i64, tpu.core_type = #tpu.core_type<tc>} {
    %c0 = arith.constant 0 : index
    %c0_0 = arith.constant 0 : index
    %0 = vector.load %arg0[%c0, %c0_0] : memref<16x64xf32, #tpu.memory_space<vmem>>, vector<16x64xf32>
    %cst = arith.constant 9.99999997E-7 : f32
    %1 = vector.broadcast %cst : f32 to vector<16x64xf32>
    %2 = arith.addf %0, %1 : vector<16x64xf32>
    %3 = math.sqrt %2 : vector<16x64xf32>
    %4 = arith.mulf %3, %3 : vector<16x64xf32>
    %cst_1 = arith.constant dense<0.000000e+00> : vector<16xf32>
    %5 = vector.multi_reduction <add>, %4, %cst_1 [1] : vector<16x64xf32> to vector<16xf32>
    %6 = vector.shape_cast %5 : vector<16xf32> to vector<16x1xf32>
    %7 = math.sqrt %6 : vector<16x1xf32>
    %cst_2 = arith.constant 9.99999996E-13 : f32
    %8 = vector.broadcast %cst_2 : f32 to vector<16x1xf32>
    %9 = arith.maximumf %7, %8 : vector<16x1xf32>
    %10 = vector.broadcast %9 : vector<16x1xf32> to vector<16x64xf32>
    %11 = arith.divf %3, %10 : vector<16x64xf32>
    %12 = tpu.iota {dimensions = array<i32: 0>} : vector<16x1xi32>
    %c4_i32 = arith.constant 4 : i32
    %13 = vector.broadcast %c4_i32 : i32 to vector<16x1xi32>
    %14 = arith.cmpi slt, %12, %13 : vector<16x1xi32>
    %cst_3 = arith.constant 0.000000e+00 : f32
    %15 = vector.shape_cast %14 : vector<16x1xi1> to vector<16x1xi1>
    %16 = vector.broadcast %15 : vector<16x1xi1> to vector<16x64xi1>
    %17 = vector.broadcast %cst_3 : f32 to vector<16x64xf32>
    %18 = arith.select %16, %11, %17 : vector<16x64xi1>, vector<16x64xf32>
    %cst_4 = arith.constant dense<0.000000e+00> : vector<64xf32>
    %19 = vector.multi_reduction <add>, %18, %cst_4 [0] : vector<16x64xf32> to vector<64xf32>
    %20 = vector.shape_cast %19 : vector<64xf32> to vector<1x64xf32>
    %cst_5 = arith.constant 2.500000e-01 : f32
    %21 = vector.broadcast %cst_5 : f32 to vector<1x64xf32>
    %22 = arith.mulf %20, %21 : vector<1x64xf32>
    %cst_6 = arith.constant 0.000000e+00 : f32
    %23 = vector.shape_cast %14 : vector<16x1xi1> to vector<16x1xi1>
    %24 = vector.broadcast %23 : vector<16x1xi1> to vector<16x64xi1>
    %25 = vector.broadcast %cst_6 : f32 to vector<16x64xf32>
    %26 = arith.select %24, %25, %11 : vector<16x64xi1>, vector<16x64xf32>
    %cst_7 = arith.constant dense<0.000000e+00> : vector<64xf32>
    %27 = vector.multi_reduction <add>, %26, %cst_7 [0] : vector<16x64xf32> to vector<64xf32>
    %28 = vector.shape_cast %27 : vector<64xf32> to vector<1x64xf32>
    %cst_8 = arith.constant 0.0833333358 : f32
    %29 = vector.broadcast %cst_8 : f32 to vector<1x64xf32>
    %30 = arith.mulf %28, %29 : vector<1x64xf32>
    %31 = vector.shape_cast %14 : vector<16x1xi1> to vector<16x1xi1>
    %32 = vector.broadcast %31 : vector<16x1xi1> to vector<16x64xi1>
    %33 = vector.shape_cast %22 : vector<1x64xf32> to vector<1x64xf32>
    %34 = vector.broadcast %33 : vector<1x64xf32> to vector<16x64xf32>
    %35 = vector.shape_cast %30 : vector<1x64xf32> to vector<1x64xf32>
    %36 = vector.broadcast %35 : vector<1x64xf32> to vector<16x64xf32>
    %37 = arith.select %32, %34, %36 : vector<16x64xi1>, vector<16x64xf32>
    %38 = arith.subf %11, %37 : vector<16x64xf32>
    %39 = arith.mulf %38, %38 : vector<16x64xf32>
    %cst_9 = arith.constant dense<0.000000e+00> : vector<16xf32>
    %40 = vector.multi_reduction <add>, %39, %cst_9 [1] : vector<16x64xf32> to vector<16xf32>
    %41 = vector.shape_cast %40 : vector<16xf32> to vector<16x1xf32>
    %42 = math.sqrt %41 : vector<16x1xf32>
    %cst_10 = arith.constant 9.99999996E-13 : f32
    %43 = vector.broadcast %cst_10 : f32 to vector<16x1xf32>
    %44 = arith.maximumf %42, %43 : vector<16x1xf32>
    %45 = vector.broadcast %44 : vector<16x1xf32> to vector<16x64xf32>
    %46 = arith.divf %38, %45 : vector<16x64xf32>
    %47 = vector.extract_strided_slice %46 {offsets = [0, 0], sizes = [4, 64], strides = [1, 1]} : vector<16x64xf32> to vector<4x64xf32>
    %48 = vector.extract_strided_slice %46 {offsets = [4, 0], sizes = [12, 64], strides = [1, 1]} : vector<16x64xf32> to vector<12x64xf32>
    %49 = tpu.transpose %48, [1, 0] : vector<12x64xf32> -> vector<64x12xf32>
    %c0_11 = arith.constant 0 : index
    %c0_12 = arith.constant 0 : index
    %50 = vector.load %arg1[%c0_11, %c0_12] : memref<4x4xf32, #tpu.memory_space<vmem>>, vector<4x4xf32>
    %c0_13 = arith.constant 0 : index
    %c0_14 = arith.constant 0 : index
    %51 = vector.load %arg2[%c0_13, %c0_14] : memref<4x4xf32, #tpu.memory_space<vmem>>, vector<4x4xf32>
    %52 = arith.mulf %49, %49 : vector<64x12xf32>
    %cst_15 = arith.constant dense<0.000000e+00> : vector<12xf32>
    %53 = vector.multi_reduction <add>, %52, %cst_15 [0] : vector<64x12xf32> to vector<12xf32>
    %54 = vector.shape_cast %53 : vector<12xf32> to vector<1x12xf32>
    %cst_16 = arith.constant dense<0.000000e+00> : vector<4x64xf32>
    %55 = tpu.matmul %50, %47, %cst_16 {dimension_numbers = #tpu.dot_dimension_numbers<[1], [0], [0], [1], [0, 0, 1, 1], [], []>} : vector<4x4xf32>, vector<4x64xf32>, vector<4x64xf32> -> vector<4x64xf32>
    %cst_17 = arith.constant dense<0.000000e+00> : vector<4xf32>
    %56 = vector.multi_reduction <add>, %50, %cst_17 [1] : vector<4x4xf32> to vector<4xf32>
    %57 = vector.shape_cast %56 : vector<4xf32> to vector<4x1xf32>
    %cst_18 = arith.constant dense<0.000000e+00> : vector<4x64xf32>
    %58 = tpu.matmul %51, %47, %cst_18 {dimension_numbers = #tpu.dot_dimension_numbers<[1], [0], [0], [1], [0, 0, 1, 1], [], []>} : vector<4x4xf32>, vector<4x64xf32>, vector<4x64xf32> -> vector<4x64xf32>
    %cst_19 = arith.constant 1.000000e+00 : f32
    %59 = vector.broadcast %cst_19 : f32 to vector<4x64xf32>
    %60 = arith.mulf %58, %59 : vector<4x64xf32>
    %c0_i32 = arith.constant 0 : i32
    %c10_i32 = arith.constant 10 : i32
    %61 = arith.addi %c0_i32, %c10_i32 : i32
    %c1_i32 = arith.constant 1 : i32
    %62 = scf.for %arg6 = %c0_i32 to %61 step %c1_i32 iter_args(%arg7 = %60) -> (vector<4x64xf32>)  : i32 {
      %109 = arith.mulf %arg7, %arg7 : vector<4x64xf32>
      %cst_40 = arith.constant dense<0.000000e+00> : vector<4xf32>
      %110 = vector.multi_reduction <add>, %109, %cst_40 [1] : vector<4x64xf32> to vector<4xf32>
      %111 = vector.shape_cast %110 : vector<4xf32> to vector<4x1xf32>
      %cst_41 = arith.constant dense<0.000000e+00> : vector<4x12xf32>
      %112 = tpu.matmul %arg7, %49, %cst_41 {dimension_numbers = #tpu.dot_dimension_numbers<[1], [0], [0], [1], [0, 0, 1, 1], [], []>} : vector<4x64xf32>, vector<64x12xf32>, vector<4x12xf32> -> vector<4x12xf32>
      %113 = vector.broadcast %54 : vector<1x12xf32> to vector<4x12xf32>
      %114 = vector.broadcast %111 : vector<4x1xf32> to vector<4x12xf32>
      %115 = arith.addf %113, %114 : vector<4x12xf32>
      %cst_42 = arith.constant 2.000000e+00 : f32
      %116 = vector.broadcast %cst_42 : f32 to vector<4x12xf32>
      %117 = arith.mulf %116, %112 : vector<4x12xf32>
      %118 = arith.subf %115, %117 : vector<4x12xf32>
      %cst_43 = arith.constant -1.000000e+01 : f32
      %119 = vector.broadcast %cst_43 : f32 to vector<4x12xf32>
      %120 = arith.mulf %119, %118 : vector<4x12xf32>
      %121 = math.exp %120 : vector<4x12xf32>
      %122 = vector.shape_cast %121 : vector<4x12xf32> to vector<1x4x12xf32>
      %cst_44 = arith.constant dense<0.000000e+00> : vector<1xf32>
      %123 = vector.multi_reduction <add>, %122, %cst_44 [1, 2] : vector<1x4x12xf32> to vector<1xf32>
      %124 = vector.shape_cast %123 : vector<1xf32> to vector<1x1x1xf32>
      %125 = vector.extract %124[0, 0, 0] : f32 from vector<1x1x1xf32>
      %126 = vector.broadcast %125 : f32 to vector<4x12xf32>
      %127 = arith.divf %121, %126 : vector<4x12xf32>
      %cst_45 = arith.constant 0.000000e+00 : f32
      %128 = vector.broadcast %cst_45 : f32 to vector<1x12xf32>
      %cst_46 = arith.constant dense<0.000000e+00> : vector<12xf32>
      %129 = vector.multi_reduction <add>, %127, %cst_46 [0] : vector<4x12xf32> to vector<12xf32>
      %130 = vector.shape_cast %129 : vector<12xf32> to vector<1x12xf32>
      %c0_i32_47 = arith.constant 0 : i32
      %131:4 = scf.while (%arg8 = %127, %arg9 = %128, %arg10 = %130, %arg11 = %c0_i32_47) : (vector<4x12xf32>, vector<1x12xf32>, vector<1x12xf32>, i32) -> (vector<4x12xf32>, vector<1x12xf32>, vector<1x12xf32>, i32) {
        %c1000_i32 = arith.constant 1000 : i32
        %143 = arith.cmpi slt, %arg11, %c1000_i32 : i32
        %144 = arith.subf %arg9, %arg10 : vector<1x12xf32>
        %145 = math.absf %144 : vector<1x12xf32>
        %146 = vector.shape_cast %145 : vector<1x12xf32> to vector<1x1x12xf32>
        %cst_51 = arith.constant dense<0xFF800000> : vector<1xf32>
        %147 = vector.multi_reduction <maximumf>, %146, %cst_51 [1, 2] : vector<1x1x12xf32> to vector<1xf32>
        %148 = vector.shape_cast %147 : vector<1xf32> to vector<1x1x1xf32>
        %149 = vector.extract %148[0, 0, 0] : f32 from vector<1x1x1xf32>
        %cst_52 = arith.constant 9.99999997E-7 : f32
        %150 = arith.cmpf ogt, %149, %cst_52 : f32
        %151 = arith.andi %143, %150 : i1
        scf.condition(%151) %arg8, %arg9, %arg10, %arg11 : vector<4x12xf32>, vector<1x12xf32>, vector<1x12xf32>, i32
      } do {
      ^bb0(%arg8: vector<4x12xf32>, %arg9: vector<1x12xf32>, %arg10: vector<1x12xf32>, %arg11: i32):
        %143 = tpu.reciprocal %arg10 {approx = true} : vector<1x12xf32> -> vector<1x12xf32>
        %144 = vector.broadcast %143 : vector<1x12xf32> to vector<4x12xf32>
        %145 = arith.mulf %arg8, %144 : vector<4x12xf32>
        %cst_51 = arith.constant dense<0.000000e+00> : vector<4xf32>
        %146 = vector.multi_reduction <add>, %145, %cst_51 [1] : vector<4x12xf32> to vector<4xf32>
        %147 = vector.shape_cast %146 : vector<4xf32> to vector<4x1xf32>
        %148 = tpu.reciprocal %147 {approx = true} : vector<4x1xf32> -> vector<4x1xf32>
        %cst_52 = arith.constant 3.000000e+00 : f32
        %149 = vector.broadcast %cst_52 : f32 to vector<4x1xf32>
        %150 = arith.mulf %149, %148 : vector<4x1xf32>
        %151 = vector.broadcast %150 : vector<4x1xf32> to vector<4x12xf32>
        %152 = arith.mulf %145, %151 : vector<4x12xf32>
        %cst_53 = arith.constant dense<0.000000e+00> : vector<12xf32>
        %153 = vector.multi_reduction <add>, %152, %cst_53 [0] : vector<4x12xf32> to vector<12xf32>
        %154 = vector.shape_cast %153 : vector<12xf32> to vector<1x12xf32>
        %c1_i32_54 = arith.constant 1 : i32
        %155 = arith.addi %arg11, %c1_i32_54 : i32
        scf.yield %152, %arg10, %154, %155 : vector<4x12xf32>, vector<1x12xf32>, vector<1x12xf32>, i32
      }
      %cst_48 = arith.constant dense<0.000000e+00> : vector<4x64xf32>
      %132 = tpu.matmul %131#0, %48, %cst_48 {dimension_numbers = #tpu.dot_dimension_numbers<[1], [0], [0], [1], [0, 0, 1, 1], [], []>} : vector<4x12xf32>, vector<12x64xf32>, vector<4x64xf32> -> vector<4x64xf32>
      %133 = arith.addf %55, %132 : vector<4x64xf32>
      %cst_49 = arith.constant dense<0.000000e+00> : vector<4xf32>
      %134 = vector.multi_reduction <add>, %131#0, %cst_49 [1] : vector<4x12xf32> to vector<4xf32>
      %135 = vector.shape_cast %134 : vector<4xf32> to vector<4x1xf32>
      %136 = arith.addf %57, %135 : vector<4x1xf32>
      %137 = vector.broadcast %136 : vector<4x1xf32> to vector<4x64xf32>
      %138 = arith.divf %133, %137 : vector<4x64xf32>
      %139 = arith.subf %138, %arg7 : vector<4x64xf32>
      %cst_50 = arith.constant 2.000000e-01 : f32
      %140 = vector.broadcast %cst_50 : f32 to vector<4x64xf32>
      %141 = arith.mulf %140, %139 : vector<4x64xf32>
      %142 = arith.addf %arg7, %141 : vector<4x64xf32>
      scf.yield %142 : vector<4x64xf32>
    }
    %63 = arith.mulf %62, %62 : vector<4x64xf32>
    %cst_20 = arith.constant dense<0.000000e+00> : vector<4xf32>
    %64 = vector.multi_reduction <add>, %63, %cst_20 [1] : vector<4x64xf32> to vector<4xf32>
    %65 = vector.shape_cast %64 : vector<4xf32> to vector<4x1xf32>
    %cst_21 = arith.constant dense<0.000000e+00> : vector<4x12xf32>
    %66 = tpu.matmul %62, %49, %cst_21 {dimension_numbers = #tpu.dot_dimension_numbers<[1], [0], [0], [1], [0, 0, 1, 1], [], []>} : vector<4x64xf32>, vector<64x12xf32>, vector<4x12xf32> -> vector<4x12xf32>
    %67 = vector.broadcast %54 : vector<1x12xf32> to vector<4x12xf32>
    %68 = vector.broadcast %65 : vector<4x1xf32> to vector<4x12xf32>
    %69 = arith.addf %67, %68 : vector<4x12xf32>
    %cst_22 = arith.constant 2.000000e+00 : f32
    %70 = vector.broadcast %cst_22 : f32 to vector<4x12xf32>
    %71 = arith.mulf %70, %66 : vector<4x12xf32>
    %72 = arith.subf %69, %71 : vector<4x12xf32>
    %cst_23 = arith.constant -1.000000e+01 : f32
    %73 = vector.broadcast %cst_23 : f32 to vector<4x12xf32>
    %74 = arith.mulf %73, %72 : vector<4x12xf32>
    %75 = math.exp %74 : vector<4x12xf32>
    %76 = vector.shape_cast %75 : vector<4x12xf32> to vector<1x4x12xf32>
    %cst_24 = arith.constant dense<0.000000e+00> : vector<1xf32>
    %77 = vector.multi_reduction <add>, %76, %cst_24 [1, 2] : vector<1x4x12xf32> to vector<1xf32>
    %78 = vector.shape_cast %77 : vector<1xf32> to vector<1x1x1xf32>
    %79 = vector.extract %78[0, 0, 0] : f32 from vector<1x1x1xf32>
    %80 = vector.broadcast %79 : f32 to vector<4x12xf32>
    %81 = arith.divf %75, %80 : vector<4x12xf32>
    %cst_25 = arith.constant 0.000000e+00 : f32
    %82 = vector.broadcast %cst_25 : f32 to vector<1x12xf32>
    %cst_26 = arith.constant dense<0.000000e+00> : vector<12xf32>
    %83 = vector.multi_reduction <add>, %81, %cst_26 [0] : vector<4x12xf32> to vector<12xf32>
    %84 = vector.shape_cast %83 : vector<12xf32> to vector<1x12xf32>
    %c0_i32_27 = arith.constant 0 : i32
    %85:4 = scf.while (%arg6 = %81, %arg7 = %82, %arg8 = %84, %arg9 = %c0_i32_27) : (vector<4x12xf32>, vector<1x12xf32>, vector<1x12xf32>, i32) -> (vector<4x12xf32>, vector<1x12xf32>, vector<1x12xf32>, i32) {
      %c1000_i32 = arith.constant 1000 : i32
      %109 = arith.cmpi slt, %arg9, %c1000_i32 : i32
      %110 = arith.subf %arg7, %arg8 : vector<1x12xf32>
      %111 = math.absf %110 : vector<1x12xf32>
      %112 = vector.shape_cast %111 : vector<1x12xf32> to vector<1x1x12xf32>
      %cst_40 = arith.constant dense<0xFF800000> : vector<1xf32>
      %113 = vector.multi_reduction <maximumf>, %112, %cst_40 [1, 2] : vector<1x1x12xf32> to vector<1xf32>
      %114 = vector.shape_cast %113 : vector<1xf32> to vector<1x1x1xf32>
      %115 = vector.extract %114[0, 0, 0] : f32 from vector<1x1x1xf32>
      %cst_41 = arith.constant 9.99999997E-7 : f32
      %116 = arith.cmpf ogt, %115, %cst_41 : f32
      %117 = arith.andi %109, %116 : i1
      scf.condition(%117) %arg6, %arg7, %arg8, %arg9 : vector<4x12xf32>, vector<1x12xf32>, vector<1x12xf32>, i32
    } do {
    ^bb0(%arg6: vector<4x12xf32>, %arg7: vector<1x12xf32>, %arg8: vector<1x12xf32>, %arg9: i32):
      %109 = tpu.reciprocal %arg8 {approx = true} : vector<1x12xf32> -> vector<1x12xf32>
      %110 = vector.broadcast %109 : vector<1x12xf32> to vector<4x12xf32>
      %111 = arith.mulf %arg6, %110 : vector<4x12xf32>
      %cst_40 = arith.constant dense<0.000000e+00> : vector<4xf32>
      %112 = vector.multi_reduction <add>, %111, %cst_40 [1] : vector<4x12xf32> to vector<4xf32>
      %113 = vector.shape_cast %112 : vector<4xf32> to vector<4x1xf32>
      %114 = tpu.reciprocal %113 {approx = true} : vector<4x1xf32> -> vector<4x1xf32>
      %cst_41 = arith.constant 3.000000e+00 : f32
      %115 = vector.broadcast %cst_41 : f32 to vector<4x1xf32>
      %116 = arith.mulf %115, %114 : vector<4x1xf32>
      %117 = vector.broadcast %116 : vector<4x1xf32> to vector<4x12xf32>
      %118 = arith.mulf %111, %117 : vector<4x12xf32>
      %cst_42 = arith.constant dense<0.000000e+00> : vector<12xf32>
      %119 = vector.multi_reduction <add>, %118, %cst_42 [0] : vector<4x12xf32> to vector<12xf32>
      %120 = vector.shape_cast %119 : vector<12xf32> to vector<1x12xf32>
      %c1_i32_43 = arith.constant 1 : i32
      %121 = arith.addi %arg9, %c1_i32_43 : i32
      scf.yield %118, %arg8, %120, %121 : vector<4x12xf32>, vector<1x12xf32>, vector<1x12xf32>, i32
    }
    %cst_28 = arith.constant 9.99999997E-7 : f32
    %86 = vector.broadcast %cst_28 : f32 to vector<4x12xf32>
    %87 = arith.addf %85#0, %86 : vector<4x12xf32>
    %88 = math.log %87 : vector<4x12xf32>
    %c0_29 = arith.constant 0 : index
    %c0_30 = arith.constant 0 : index
    %89 = vector.load %arg4[%c0_29, %c0_30] : memref<4x12xf32, #tpu.memory_space<vmem>>, vector<4x12xf32>
    tpu.vector_store %arg4[%c0_29, %c0_30], %88 {strides = array<i32>} : memref<4x12xf32, #tpu.memory_space<vmem>>, vector<4x12xf32>,
    %cst_31 = arith.constant dense<0xFF800000> : vector<12xf32>
    %90 = vector.multi_reduction <maximumf>, %85#0, %cst_31 [0] : vector<4x12xf32> to vector<12xf32>
    %91 = vector.shape_cast %90 : vector<12xf32> to vector<1x12xf32>
    %92 = tpu.iota {dimensions = array<i32: 0>} : vector<4x12xi32>
    %93 = vector.broadcast %91 : vector<1x12xf32> to vector<4x12xf32>
    %94 = arith.cmpf oge, %85#0, %93 : vector<4x12xf32>
    %c4_i32_32 = arith.constant 4 : i32
    %95 = vector.broadcast %c4_i32_32 : i32 to vector<4x12xi32>
    %96 = arith.select %94, %92, %95 : vector<4x12xi1>, vector<4x12xi32>
    %cst_33 = arith.constant dense<2147483647> : vector<12xi32>
    %97 = vector.multi_reduction <minsi>, %96, %cst_33 [0] : vector<4x12xi32> to vector<12xi32>
    %98 = vector.shape_cast %97 : vector<12xi32> to vector<1x12xi32>
    %c0_34 = arith.constant 0 : index
    %c0_35 = arith.constant 0 : index
    %99 = vector.load %arg3[%c0_34, %c0_35] : memref<1x12xi32, #tpu.memory_space<vmem>>, vector<1x12xi32>
    %100 = arith.cmpi eq, %98, %99 : vector<1x12xi32>
    %101 = arith.extui %100 : vector<1x12xi1> to vector<1x12xi32>
    %102 = arith.sitofp %101 : vector<1x12xi32> to vector<1x12xf32>
    %103 = vector.shape_cast %102 : vector<1x12xf32> to vector<1x1x12xf32>
    %cst_36 = arith.constant dense<0.000000e+00> : vector<1xf32>
    %104 = vector.multi_reduction <add>, %103, %cst_36 [1, 2] : vector<1x1x12xf32> to vector<1xf32>
    %105 = vector.shape_cast %104 : vector<1xf32> to vector<1x1x1xf32>
    %106 = vector.extract %105[0, 0, 0] : f32 from vector<1x1x1xf32>
    %cst_37 = arith.constant 1.200000e+01 : f32
    %107 = arith.divf %106, %cst_37 : f32
    %c0_38 = arith.constant 0 : index
    %c0_39 = arith.constant 0 : index
    %108 = memref.load %arg5[%c0_38, %c0_39] : memref<1x1xf32, #tpu.memory_space<smem>>
    memref.store %107, %arg5[%c0_38, %c0_39] : memref<1x1xf32, #tpu.memory_space<smem>>
    return
  }
}

</mosaic_0001>

<llo_original>
// kernel: pt_map_loss_forward.1
$region0: #{pt_map_loss_forward.1}
  #allocation0 [shape = 'u32[]', space=smem, size = 0x4, offset = 0x4, fixed_abs, tag = 'smem constant byte address 0x4 - core index']
  #allocation1 [shape = 'u32[72,128]{1,0:T(1,128)}', space=vmem, size = 0x9000, scoped, tag = 'internal scratch']
  %s0 = inlined_call_operand.hbm [shape: f32[16,64], index: 0, kind: input, shape index: {}]
  %s1 = inlined_call_operand.vmem [shape: f32[4,4], index: 1, kind: input, shape index: {}]
  %s2 = inlined_call_operand.vmem [shape: f32[4,4], index: 2, kind: input, shape index: {}]
  %s3 = inlined_call_operand.vmem [shape: s32[1,12], index: 3, kind: input, shape index: {}]
  %s4 = inlined_call_operand.hbm [shape: f32[4,12], index: 4, kind: output, shape index: {0}]
  %s5 = inlined_call_operand.hbm [shape: f32[1,1], index: 5, kind: output, shape index: {1}]
  %6 = xla_tuple %s4, %s5
  %s7 = sld [smem:[#allocation0]]
  $region59: #{pt_map_loss_forward.1} parent=0
    _
  %s9 = ssub.s32 1, %s7
  %s10 = scalar_select 0, %s9, %s7
  $region1: #{pt_map_loss_forward.1} parent=0
    #allocation2 [shape = 'u8[8192]{0}', space=vmem, size = 0x2000, scoped, tag = 'input window, operand 0, single buffered']
    #allocation3 [shape = 's32[1]{0}', space=sflag, size = 0x4, scoped, tag = 'scoped memory for pt_map_loss_forward.1']
    #allocation4 [shape = 's32[1]{0}', space=sflag, size = 0x4, scoped, tag = 'scoped memory for pt_map_loss_forward.1']
    #allocation5 [shape = 's32[1]{0}', space=sflag, size = 0x4, scoped, tag = 'scoped memory for pt_map_loss_forward.1']
    #allocation6 [shape = 'u8[2048]{0}', space=vmem, size = 0x800, scoped, tag = 'output window, operand 0, single buffered']
    #allocation7 [shape = 'u8[512]{0}', space=smem, size = 0x200, scoped, tag = 'output window, operand 1, single buffered']
    %11 = vsyncpa [#allocation3], 0
    %12 = vsyncpa [#allocation4], 0
    %13 = vsyncpa [#allocation5], 0
    // Predicated region
    $region2: #{pt_map_loss_forward.1} parent=1 // pred_check
      _
    $region3: #{pt_map_loss_forward.1} parent=1 // pred_check_branch
      %15 = sbr.rel (0) target = $region5
    $region4: #{pt_map_loss_forward.1} parent=1 // pred_region
      %17 = vsyncadd [#allocation3], 0
      %s18 = sshll.u32 %s0, 4
      %s19 = int_to_ptr.hbm [resolvable:$true] %s18
      %s20 = sshll.u32 [#allocation2], 4
      %s21 = int_to_ptr.vmem [resolvable:$true] %s20
      %26 = dma.hbm_to_vmem [thread:$0]  %s19, 256, %s21, [#allocation3], 128, 128, 8
    $region5: #{pt_map_loss_forward.1} parent=1 // pred_fallthru
      _
    // Predicated region
    $region6: #{pt_map_loss_forward.1} parent=1 // pred_check
      _
    $region7: #{pt_map_loss_forward.1} parent=1 // pred_check_branch
      %28 = sbr.rel (0) target = $region9
    $region8: #{pt_map_loss_forward.1} parent=1 // pred_region
      _
    $region9: #{pt_map_loss_forward.1} parent=1 // pred_fallthru
      _
    // Predicated region
    $region10: #{pt_map_loss_forward.1} parent=1 // pred_check
      _
    $region11: #{pt_map_loss_forward.1} parent=1 // pred_check_branch
      %30 = sbr.rel (0) target = $region13
    $region12: #{pt_map_loss_forward.1} parent=1 // pred_region
      _
    $region13: #{pt_map_loss_forward.1} parent=1 // pred_fallthru
      _
    // Predicated region
    $region14: #{pt_map_loss_forward.1} parent=1 // pred_check
      _
    $region15: #{pt_map_loss_forward.1} parent=1 // pred_check_branch
      %32 = sbr.rel (0) target = $region17
    $region16: #{pt_map_loss_forward.1} parent=1 // pred_region
      _
    $region17: #{pt_map_loss_forward.1} parent=1 // pred_fallthru
      _
    // Predicated region
    $region18: #{pt_map_loss_forward.1} parent=1 // pred_check
      _
    $region19: #{pt_map_loss_forward.1} parent=1 // pred_check_branch
      %34 = sbr.rel (0) target = $region21
    $region20: #{pt_map_loss_forward.1} parent=1 // pred_region
      %36 = dma.done [#allocation3], 256
    $region21: #{pt_map_loss_forward.1} parent=1 // pred_fallthru
      _
    %v37 = vld [vmem:[#allocation2] sm:$0xff]
    %v38 = vld [vmem:[#allocation2 + $0x8] sm:$0xff]
    %v39 = vadd.f32 %v37, 1e-06
    %v40 = vadd.f32 %v38, 1e-06
    %v41 = vrsqrt.pop %v39
    %v42 = vmul.f32 %v41, %v39
    %v43 = vmul.f32 %v42, %v41
    %v44 = vmul.f32 0.5, %v43
    %v45 = vsub.f32 1.5, %v44
    %v46 = vmul.f32 %v41, %v45
    %v47 = vmul.f32 %v39, %v46
    %vm48 = vcmp.eq.f32.partialorder %v39, inf
    %v49 = vsel %vm48, %v39, %v47
    %vm50 = vcmp.eq.f32.partialorder %v39, 0.0
    %v51 = vand.u32 %v39, 2147483648
    %v52 = vsel %vm50, %v51, %v49
    %v53 = vrsqrt.pop %v40
    %v54 = vmul.f32 %v53, %v40
    %v55 = vmul.f32 %v54, %v53
    %v56 = vmul.f32 0.5, %v55
    %v57 = vsub.f32 1.5, %v56
    %v58 = vmul.f32 %v53, %v57
    %v59 = vmul.f32 %v40, %v58
    %vm60 = vcmp.eq.f32.partialorder %v40, inf
    %v61 = vsel %vm60, %v40, %v59
    %vm62 = vcmp.eq.f32.partialorder %v40, 0.0
    %v63 = vand.u32 %v40, 2147483648
    %v64 = vsel %vm62, %v63, %v61
    %v65 = vmul.f32 %v52, %v52
    %v66 = vmul.f32 %v64, %v64
    %vm67 = vcmask 523264
    %v68 = vsel %vm67, %v65, 0.0
    %69 = vadd.xlane.f32.xlu0 %v68
    %v70 = vpop.xlane.xlu0 %69
    %v71 = vsel %vm67, %v66, 0.0
    %72 = vadd.xlane.f32.xlu0 %v71
    %v73 = vpop.xlane.xlu0 %72
    %v74 = vrsqrt.pop %v70
    %v75 = vmul.f32 %v74, %v70
    %v76 = vmul.f32 %v75, %v74
    %v77 = vmul.f32 0.5, %v76
    %v78 = vsub.f32 1.5, %v77
    %v79 = vmul.f32 %v74, %v78
    %v80 = vmul.f32 %v70, %v79
    %vm81 = vcmp.eq.f32.partialorder %v70, inf
    %v82 = vsel %vm81, %v70, %v80
    %vm83 = vcmp.eq.f32.partialorder %v70, 0.0
    %v84 = vand.u32 %v70, 2147483648
    %v85 = vsel %vm83, %v84, %v82
    %v86 = vrsqrt.pop %v73
    %v87 = vmul.f32 %v86, %v73
    %v88 = vmul.f32 %v87, %v86
    %v89 = vmul.f32 0.5, %v88
    %v90 = vsub.f32 1.5, %v89
    %v91 = vmul.f32 %v86, %v90
    %v92 = vmul.f32 %v73, %v91
    %vm93 = vcmp.eq.f32.partialorder %v73, inf
    %v94 = vsel %vm93, %v73, %v92
    %vm95 = vcmp.eq.f32.partialorder %v73, 0.0
    %v96 = vand.u32 %v73, 2147483648
    %v97 = vsel %vm95, %v96, %v94
    %v98 = vmax.f32 %v85, 1e-12
    %v99 = vmax.f32 %v97, 1e-12
    %v100 = vrcp.pop %v98
    %v101 = vmul.f32 %v98, %v100
    %v102 = vsub.f32 1.0, %v101
    %v103 = vmul.f32 %v100, %v102
    %v104 = vadd.f32 %v100, %v103
    %vm105 = vweird.f32 %v98
    %vm106 = vweird.f32 %v100
    %vm107 = vmor %vm105, %vm106
    %v108 = vsel %vm107, %v100, %v104
    %v109 = vand.u32 2147483647, %v98
    %vm110 = vcmp.eq.f32.partialorder %v109, 8.507059e+37
    %v111 = vand.u32 %v98, 2147483648
    %v112 = vor.u32 1.1754944e-38, %v111
    %v113 = vsel %vm110, %v112, %v108
    %v114 = vmul.f32 %v52, %v113
    %v115 = vrcp.pop %v99
    %v116 = vmul.f32 %v99, %v115
    %v117 = vsub.f32 1.0, %v116
    %v118 = vmul.f32 %v115, %v117
    %v119 = vadd.f32 %v115, %v118
    %vm120 = vweird.f32 %v99
    %vm121 = vweird.f32 %v115
    %vm122 = vmor %vm120, %vm121
    %v123 = vsel %vm122, %v115, %v119
    %v124 = vand.u32 2147483647, %v99
    %vm125 = vcmp.eq.f32.partialorder %v124, 8.507059e+37
    %v126 = vand.u32 %v99, 2147483648
    %v127 = vor.u32 1.1754944e-38, %v126
    %v128 = vsel %vm125, %v127, %v123
    %v129 = vmul.f32 %v64, %v128
    %v130 = vlaneseq
    %v131 = vshrl.u32 %v130, 7
    %v132 = vadd.s32 %v131, 8
    %vm133 = vcmp.lt.s32.totalorder %v131, 4
    %vm134 = vcmp.lt.s32.totalorder %v132, 4
    %v135 = vsel %vm133, 1, 0
    %v136 = vsel %vm134, 1, 0
    %vm137 = vcmp.eq.s32.totalorder %v135, 1
    %vm138 = vcmp.eq.s32.totalorder %v136, 1
    %v139 = vsel %vm137, %v114, 0.0
    %v140 = vsel %vm138, %v129, 0.0
    %v141 = vsel %vm67, %v139, 0.0
    %v142 = vsel %vm67, %v140, 0.0
    %v143 = vadd.f32 %v141, %v142
    %v144 = vrot.slane %v143, 4
    %v145 = vadd.f32 %v143, %v144
    %v146 = vrot.slane %v145, 2
    %v147 = vadd.f32 %v145, %v146
    %v148 = vrot.slane %v147, 1
    %v149 = vadd.f32 %v147, %v148
    %v150 = vmul.f32 %v149, 0.25
    %v151 = vsel %vm137, 0.0, %v114
    %v152 = vsel %vm138, 0.0, %v129
    %v153 = vsel %vm67, %v151, 0.0
    %v154 = vsel %vm67, %v152, 0.0
    %v155 = vadd.f32 %v153, %v154
    %v156 = vrot.slane %v155, 4
    %v157 = vadd.f32 %v155, %v156
    %v158 = vrot.slane %v157, 2
    %v159 = vadd.f32 %v157, %v158
    %v160 = vrot.slane %v159, 1
    %v161 = vadd.f32 %v159, %v160
    %v162 = vmul.f32 %v161, 0.083333336
    %v163 = vsel %vm137, %v150, %v162
    %v164 = vsel %vm138, %v150, %v162
    %v165 = vsub.f32 %v114, %v163
    %v166 = vsub.f32 %v129, %v164
    %v167 = vmul.f32 %v165, %v165
    %v168 = vmul.f32 %v166, %v166
    %v169 = vsel %vm67, %v167, 0.0
    %170 = vadd.xlane.f32.xlu0 %v169
    %v171 = vpop.xlane.xlu0 %170
    %v172 = vsel %vm67, %v168, 0.0
    %173 = vadd.xlane.f32.xlu0 %v172
    %v174 = vpop.xlane.xlu0 %173
    %v175 = vrsqrt.pop %v171
    %v176 = vmul.f32 %v175, %v171
    %v177 = vmul.f32 %v176, %v175
    %v178 = vmul.f32 0.5, %v177
    %v179 = vsub.f32 1.5, %v178
    %v180 = vmul.f32 %v175, %v179
    %v181 = vmul.f32 %v171, %v180
    %vm182 = vcmp.eq.f32.partialorder %v171, inf
    %v183 = vsel %vm182, %v171, %v181
    %vm184 = vcmp.eq.f32.partialorder %v171, 0.0
    %v185 = vand.u32 %v171, 2147483648
    %v186 = vsel %vm184, %v185, %v183
    %v187 = vrsqrt.pop %v174
    %v188 = vmul.f32 %v187, %v174
    %v189 = vmul.f32 %v188, %v187
    %v190 = vmul.f32 0.5, %v189
    %v191 = vsub.f32 1.5, %v190
    %v192 = vmul.f32 %v187, %v191
    %v193 = vmul.f32 %v174, %v192
    %vm194 = vcmp.eq.f32.partialorder %v174, inf
    %v195 = vsel %vm194, %v174, %v193
    %vm196 = vcmp.eq.f32.partialorder %v174, 0.0
    %v197 = vand.u32 %v174, 2147483648
    %v198 = vsel %vm196, %v197, %v195
    %v199 = vmax.f32 %v186, 1e-12
    %v200 = vmax.f32 %v198, 1e-12
    %v201 = vrcp.pop %v199
    %v202 = vmul.f32 %v199, %v201
    %v203 = vsub.f32 1.0, %v202
    %v204 = vmul.f32 %v201, %v203
    %v205 = vadd.f32 %v201, %v204
    %vm206 = vweird.f32 %v199
    %vm207 = vweird.f32 %v201
    %vm208 = vmor %vm206, %vm207
    %v209 = vsel %vm208, %v201, %v205
    %v210 = vand.u32 2147483647, %v199
    %vm211 = vcmp.eq.f32.partialorder %v210, 8.507059e+37
    %v212 = vand.u32 %v199, 2147483648
    %v213 = vor.u32 1.1754944e-38, %v212
    %v214 = vsel %vm211, %v213, %v209
    %v215 = vmul.f32 %v165, %v214
    %v216 = vrcp.pop %v200
    %v217 = vmul.f32 %v200, %v216
    %v218 = vsub.f32 1.0, %v217
    %v219 = vmul.f32 %v216, %v218
    %v220 = vadd.f32 %v216, %v219
    %vm221 = vweird.f32 %v200
    %vm222 = vweird.f32 %v216
    %vm223 = vmor %vm221, %vm222
    %v224 = vsel %vm223, %v216, %v220
    %v225 = vand.u32 2147483647, %v200
    %vm226 = vcmp.eq.f32.partialorder %v225, 8.507059e+37
    %v227 = vand.u32 %v200, 2147483648
    %v228 = vor.u32 1.1754944e-38, %v227
    %v229 = vsel %vm226, %v228, %v224
    %v230 = vmul.f32 %v166, %v229
    %vm233 = vcmask 1043456
    %v234 = vrot.slane %v215, 4
    %v235 = vrot.slane %v230, 4
    %v236 = vsel %vm233, %v234, %v235
    %239 = vxpose.xlu0.b32.start [1/16] %v236, 128
    %240 = vxpose.xlu0.b32.cont [2/16] %v235, 128
    %241 = vxpose.xlu0.b32.cont [3/16] 0.0, 128
    %242 = vxpose.xlu0.b32.cont [4/16] 0.0, 128
    %243 = vxpose.xlu0.b32.cont [5/16] 0.0, 128
    %244 = vxpose.xlu0.b32.cont [6/16] 0.0, 128
    %245 = vxpose.xlu0.b32.cont [7/16] 0.0, 128
    %246 = vxpose.xlu0.b32.cont [8/16] 0.0, 128
    %247 = vxpose.xlu0.b32.cont [9/16] 0.0, 128
    %248 = vxpose.xlu0.b32.cont [10/16] 0.0, 128
    %249 = vxpose.xlu0.b32.cont [11/16] 0.0, 128
    %250 = vxpose.xlu0.b32.cont [12/16] 0.0, 128
    %251 = vxpose.xlu0.b32.cont [13/16] 0.0, 128
    %252 = vxpose.xlu0.b32.cont [14/16] 0.0, 128
    %253 = vxpose.xlu0.b32.cont [15/16] 0.0, 128
    %254 = vxpose.xlu0.b32.end [16/16] 0.0, 128
    %v255 = vpop.trf.xlu0
    %v256 = vpop.trf.xlu0
    %v257 = vpop.trf.xlu0
    %v258 = vpop.trf.xlu0
    %v259 = vpop.trf.xlu0
    %v260 = vpop.trf.xlu0
    %v261 = vpop.trf.xlu0
    %v262 = vpop.trf.xlu0
    %v263 = vpop.trf.xlu0
    %v264 = vpop.trf.xlu0
    %v265 = vpop.trf.xlu0
    %v266 = vpop.trf.xlu0
    %v267 = vpop.trf.xlu0
    %v268 = vpop.trf.xlu0
    %v269 = vpop.trf.xlu0
    %v270 = vpop.trf.xlu0
    %v271 = vld [vmem:[%s1] sm:$0xf]
    %v272 = vld [vmem:[%s2] sm:$0xf]
    %v273 = vmul.f32 %v255, %v255
    %v274 = vmul.f32 %v256, %v256
    %v275 = vmul.f32 %v257, %v257
    %v276 = vmul.f32 %v258, %v258
    %v277 = vmul.f32 %v259, %v259
    %v278 = vmul.f32 %v260, %v260
    %v279 = vmul.f32 %v261, %v261
    %v280 = vmul.f32 %v262, %v262
    %vm281 = vcmask 97280
    %v282 = vsel %vm281, %v273, 0.0
    %v283 = vsel %vm281, %v274, 0.0
    %v284 = vadd.f32 %v282, %v283
    %v285 = vsel %vm281, %v275, 0.0
    %v286 = vadd.f32 %v284, %v285
    %v287 = vsel %vm281, %v276, 0.0
    %v288 = vadd.f32 %v286, %v287
    %v289 = vsel %vm281, %v277, 0.0
    %v290 = vadd.f32 %v288, %v289
    %v291 = vsel %vm281, %v278, 0.0
    %v292 = vadd.f32 %v290, %v291
    %v293 = vsel %vm281, %v279, 0.0
    %v294 = vadd.f32 %v292, %v293
    %v295 = vsel %vm281, %v280, 0.0
    %v296 = vadd.f32 %v294, %v295
    %v297 = vrot.slane %v296, 4
    %v298 = vadd.f32 %v296, %v297
    %v299 = vrot.slane %v298, 2
    %v300 = vadd.f32 %v298, %v299
    %v301 = vrot.slane %v300, 1
    %v302 = vadd.f32 %v300, %v301
    %vm303 = vcmask 27648
    %v304 = vsel %vm303, %v271, 0.0
    %305 = vadd.xlane.f32.xlu0 %v304
    %v306 = vpop.xlane.xlu0 %305
    %vm307 = vcmask 31744
    %v309 = vsel %vm307, %v272, 0
    %v311 = vsel %vm233, %v215, 0
    %313 = vmatpush.msra.mxu0 0.0
    %314 = vmatpush.msra.mxu0 0.0
    %315 = vmatpush.msra.mxu0 0.0
    %316 = vmatpush.msra.mxu0 0.0
    %317 = vmatpush.msra.mxu0 0.0
    %318 = vmatpush.msra.mxu0 0.0
    %319 = vmatpush.msra.mxu0 0.0
    %320 = vmatpush.msra.mxu0 0.0
    %321 = vmatpush.msra.mxu0 0.0
    %322 = vmatpush.msra.mxu0 0.0
    %323 = vmatpush.msra.mxu0 0.0
    %324 = vmatpush.msra.mxu0 0.0
    %325 = vmatpush.msra.mxu0 0.0
    %326 = vmatpush.msra.mxu0 0.0
    %327 = vmatpush.msra.mxu0 0.0
    %328 = vmatpush.msra.mxu0 %v311
    %329 = vmatmul.f32.gmra.mxu0 %v309
    %v330 = vpop.f32.mrf.mxu0
    %v331 = vadd.f32 0.0, %v330
    %332 = vdwg.mxu0
    loop: start=0, step=1, limit=10
    $region22: #{pt_map_loss_forward.1} parent=1 // loop_pre_header
      _
    $region23: #{pt_map_loss_forward.1} parent=1 // loop_header
      %s334 = sphi 0, %s338
      %p335 = scmp.ge.s32.totalorder %s334, 10
      %v339 = vphi %v331, %v510
    $region24: #{pt_map_loss_forward.1} parent=1 // loop_header_branch
      %337 = sbr.rel (%p335) target = $region28
    $region25: #{pt_map_loss_forward.1} parent=1 // loop_body
      %v340 = vmul.f32 %v339, %v339
      %vm341 = vcmask 519168
      %v342 = vsel %vm341, %v340, 0.0
      %343 = vadd.xlane.f32.xlu0 %v342
      %v344 = vpop.xlane.xlu0 %343
      %v346 = vsel %vm67, %v339, 0
      %348 = vmatpush.msra.mxu0 0.0
      %349 = vmatpush.msra.mxu0 0.0
      %350 = vmatpush.msra.mxu0 0.0
      %351 = vmatpush.msra.mxu0 0.0
      %352 = vmatpush.msra.mxu0 0.0
      %353 = vmatpush.msra.mxu0 0.0
      %354 = vmatpush.msra.mxu0 0.0
      %355 = vmatpush.msra.mxu0 0.0
      %356 = vmatpush.msra.mxu0 %v262
      %357 = vmatpush.msra.mxu0 %v261
      %358 = vmatpush.msra.mxu0 %v260
      %359 = vmatpush.msra.mxu0 %v259
      %360 = vmatpush.msra.mxu0 %v258
      %361 = vmatpush.msra.mxu0 %v257
      %362 = vmatpush.msra.mxu0 %v256
      %363 = vmatpush.msra.mxu0 %v255
      %364 = vmatmul.f32.gmra.mxu0 %v346
      %v365 = vpop.f32.mrf.mxu0
      %v366 = vadd.f32 0.0, %v365
      %367 = vdwg.mxu0
      %v368 = vadd.f32 %v302, %v344
      %v369 = vmul.f32 %v366, 2.0
      %v370 = vsub.f32 %v368, %v369
      %v371 = vmul.f32 %v370, -10.0
      %v372 = vmul.f32 %v371, 1.442695
      %v373 = vpow.pop %v372
      %vm374 = vcmask 93184
      %v375 = vsel %vm374, %v373, 0.0
      %376 = vadd.xlane.f32.xlu0 %v375
      %v377 = vpop.xlane.xlu0 %376
      %v378 = vrot.slane %v377, 4
      %v379 = vadd.f32 %v377, %v378
      %v380 = vrot.slane %v379, 2
      %v381 = vadd.f32 %v379, %v380
      %v382 = vrot.slane %v381, 1
      %v383 = vadd.f32 %v381, %v382
      %s384 = vtos %v383
      %v385 = vstv %s384
      %v386 = vrcp.pop %v385
      %v387 = vmul.f32 %v385, %v386
      %v388 = vsub.f32 1.0, %v387
      %v389 = vmul.f32 %v386, %v388
      %v390 = vadd.f32 %v386, %v389
      %vm391 = vweird.f32 %v385
      %vm392 = vweird.f32 %v386
      %vm393 = vmor %vm391, %vm392
      %v394 = vsel %vm393, %v386, %v390
      %v395 = vand.u32 2147483647, %v385
      %vm396 = vcmp.eq.f32.partialorder %v395, 8.507059e+37
      %v397 = vand.u32 %v385, 2147483648
      %v398 = vor.u32 1.1754944e-38, %v397
      %v399 = vsel %vm396, %v398, %v394
      %v400 = vmul.f32 %v373, %v399
      %v401 = vsel %vm374, %v400, 0.0
      %v402 = vrot.slane %v401, 4
      %v403 = vadd.f32 %v401, %v402
      %v404 = vrot.slane %v403, 2
      %v405 = vadd.f32 %v403, %v404
      %v406 = vrot.slane %v405, 1
      %v407 = vadd.f32 %v405, %v406
      // While loop
      $region29: #{pt_map_loss_forward.1} parent=25 // loop_pre_header
        _
      $region30: #{pt_map_loss_forward.1} parent=25 // loop_header
        %v409 = vphi %v400, %v432
        %v410 = vphi 0.0, %v411
        %v411 = vphi %v407, %v439
        %s412 = sphi 0, %s440
        %p413 = scmp.lt.s32.totalorder %s412, 1000
        %v414 = vsub.f32 %v410, %v411
        %v415 = vand.u32 2147483647, %v414
        %v416 = vsel %vm281, %v415, -inf
        %417 = vmax.xlane.f32.xlu0 %v416
        %v418 = vpop.xlane.xlu0 %417
        %s419 = vtos %v418
        %p420 = scmp.gt.f32.partialorder %s419, 1e-06
        %p421 = pnand %p413, %p420
        %p422 = pneg %p421
      $region31: #{pt_map_loss_forward.1} parent=25 // loop_header_branch
        %424 = sbr.rel (%p421) target = $region35
      $region32: #{pt_map_loss_forward.1} parent=25 // loop_body
        %v425 = vrcp.pop %v411
        %v426 = vmul.f32 %v409, %v425
        %v427 = vsel %vm374, %v426, 0.0
        %428 = vadd.xlane.f32.xlu0 %v427
        %v429 = vpop.xlane.xlu0 %428
        %v430 = vrcp.pop %v429
        %v431 = vmul.f32 %v430, 3.0
        %v432 = vmul.f32 %v426, %v431
        %v433 = vsel %vm374, %v432, 0.0
        %v434 = vrot.slane %v433, 4
        %v435 = vadd.f32 %v433, %v434
        %v436 = vrot.slane %v435, 2
        %v437 = vadd.f32 %v435, %v436
        %v438 = vrot.slane %v437, 1
        %v439 = vadd.f32 %v437, %v438
        %s440 = sadd.s32 %s412, 1
      $region33: #{pt_map_loss_forward.1} parent=25 // loop_footer
        _
      $region34: #{pt_map_loss_forward.1} parent=25 // loop_footer_branch
        %408 = sbr.rel target = $region30
      $region35: #{pt_map_loss_forward.1} parent=25 // loop_exit
        _
      %v442 = vsel %vm281, %v409, 0
      %v444 = vsel %vm233, %v235, 0
      %446 = vmatpush.msra.mxu0 0.0
      %447 = vmatpush.msra.mxu0 0.0
      %448 = vmatpush.msra.mxu0 0.0
      %449 = vmatpush.msra.mxu0 0.0
      %450 = vmatpush.msra.mxu0 0.0
      %451 = vmatpush.msra.mxu0 0.0
      %452 = vmatpush.msra.mxu0 0.0
      %453 = vmatpush.msra.mxu0 0.0
      %454 = vmatpush.msra.mxu0 0.0
      %455 = vmatpush.msra.mxu0 0.0
      %456 = vmatpush.msra.mxu0 0.0
      %457 = vmatpush.msra.mxu0 0.0
      %458 = vmatpush.msra.mxu0 0.0
      %459 = vmatpush.msra.mxu0 0.0
      %460 = vmatpush.msra.mxu0 %v444
      %461 = vmatpush.msra.mxu0 %v236
      %462 = vmatmul.f32.gmra.mxu0 %v442
      %v463 = vpop.f32.mrf.mxu0
      %v464 = vadd.f32 0.0, %v463
      %465 = vdwg.mxu0
      %v467 = vsel %vm307, %v271, 0
      %469 = vmatpush.msra.mxu0 0.0
      %470 = vmatpush.msra.mxu0 0.0
      %471 = vmatpush.msra.mxu0 0.0
      %472 = vmatpush.msra.mxu0 0.0
      %473 = vmatpush.msra.mxu0 0.0
      %474 = vmatpush.msra.mxu0 0.0
      %475 = vmatpush.msra.mxu0 0.0
      %476 = vmatpush.msra.mxu0 0.0
      %477 = vmatpush.msra.mxu0 0.0
      %478 = vmatpush.msra.mxu0 0.0
      %479 = vmatpush.msra.mxu0 0.0
      %480 = vmatpush.msra.mxu0 0.0
      %481 = vmatpush.msra.mxu0 0.0
      %482 = vmatpush.msra.mxu0 0.0
      %483 = vmatpush.msra.mxu0 0.0
      %484 = vmatpush.msra.mxu0 %v311
      %485 = vmatmul.f32.gmra.mxu0 %v467
      %v486 = vpop.f32.mrf.mxu0
      %v487 = vadd.f32 %v464, %v486
      %488 = vdwg.mxu0
      %v489 = vsel %vm374, %v409, 0.0
      %490 = vadd.xlane.f32.xlu0 %v489
      %v491 = vpop.xlane.xlu0 %490
      %v492 = vadd.f32 %v306, %v491
      %v493 = vrcp.pop %v492
      %v494 = vmul.f32 %v492, %v493
      %v495 = vsub.f32 1.0, %v494
      %v496 = vmul.f32 %v493, %v495
      %v497 = vadd.f32 %v493, %v496
      %vm498 = vweird.f32 %v492
      %vm499 = vweird.f32 %v493
      %vm500 = vmor %vm498, %vm499
      %v501 = vsel %vm500, %v493, %v497
      %v502 = vand.u32 2147483647, %v492
      %vm503 = vcmp.eq.f32.partialorder %v502, 8.507059e+37
      %v504 = vand.u32 %v492, 2147483648
      %v505 = vor.u32 1.1754944e-38, %v504
      %v506 = vsel %vm503, %v505, %v501
      %v507 = vmul.f32 %v487, %v506
      %v508 = vsub.f32 %v507, %v339
      %v509 = vmul.f32 %v508, 0.2
      %v510 = vadd.f32 %v339, %v509
    $region26: #{pt_map_loss_forward.1} parent=1 // loop_footer
      %s338 = sadd.s32 1, %s334
    $region27: #{pt_map_loss_forward.1} parent=1 // loop_footer_branch
      %333 = sbr.rel target = $region23
    $region28: #{pt_map_loss_forward.1} parent=1 // loop_exit
      _
    %v511 = vmul.f32 %v339, %v339
    %vm512 = vcmask 519168
    %v513 = vsel %vm512, %v511, 0.0
    %514 = vadd.xlane.f32.xlu0 %v513
    %v515 = vpop.xlane.xlu0 %514
    %v517 = vsel %vm67, %v339, 0
    %519 = vmatpush.msra.mxu0 0.0
    %520 = vmatpush.msra.mxu0 0.0
    %521 = vmatpush.msra.mxu0 0.0
    %522 = vmatpush.msra.mxu0 0.0
    %523 = vmatpush.msra.mxu0 0.0
    %524 = vmatpush.msra.mxu0 0.0
    %525 = vmatpush.msra.mxu0 0.0
    %526 = vmatpush.msra.mxu0 0.0
    %527 = vmatpush.msra.mxu0 %v262
    %528 = vmatpush.msra.mxu0 %v261
    %529 = vmatpush.msra.mxu0 %v260
    %530 = vmatpush.msra.mxu0 %v259
    %531 = vmatpush.msra.mxu0 %v258
    %532 = vmatpush.msra.mxu0 %v257
    %533 = vmatpush.msra.mxu0 %v256
    %534 = vmatpush.msra.mxu0 %v255
    %535 = vmatmul.f32.gmra.mxu0 %v517
    %v536 = vpop.f32.mrf.mxu0
    %v537 = vadd.f32 0.0, %v536
    %538 = vdwg.mxu0
    %v539 = vadd.f32 %v302, %v515
    %v540 = vmul.f32 %v537, 2.0
    %v541 = vsub.f32 %v539, %v540
    %v542 = vmul.f32 %v541, -10.0
    %v543 = vmul.f32 %v542, 1.442695
    %v544 = vpow.pop %v543
    %vm545 = vcmask 93184
    %v546 = vsel %vm545, %v544, 0.0
    %547 = vadd.xlane.f32.xlu0 %v546
    %v548 = vpop.xlane.xlu0 %547
    %v549 = vrot.slane %v548, 4
    %v550 = vadd.f32 %v548, %v549
    %v551 = vrot.slane %v550, 2
    %v552 = vadd.f32 %v550, %v551
    %v553 = vrot.slane %v552, 1
    %v554 = vadd.f32 %v552, %v553
    %s555 = vtos %v554
    %v556 = vstv %s555
    %v557 = vrcp.pop %v556
    %v558 = vmul.f32 %v556, %v557
    %v559 = vsub.f32 1.0, %v558
    %v560 = vmul.f32 %v557, %v559
    %v561 = vadd.f32 %v557, %v560
    %vm562 = vweird.f32 %v556
    %vm563 = vweird.f32 %v557
    %vm564 = vmor %vm562, %vm563
    %v565 = vsel %vm564, %v557, %v561
    %v566 = vand.u32 2147483647, %v556
    %vm567 = vcmp.eq.f32.partialorder %v566, 8.507059e+37
    %v568 = vand.u32 %v556, 2147483648
    %v569 = vor.u32 1.1754944e-38, %v568
    %v570 = vsel %vm567, %v569, %v565
    %v571 = vmul.f32 %v544, %v570
    %v572 = vsel %vm545, %v571, 0.0
    %v573 = vrot.slane %v572, 4
    %v574 = vadd.f32 %v572, %v573
    %v575 = vrot.slane %v574, 2
    %v576 = vadd.f32 %v574, %v575
    %v577 = vrot.slane %v576, 1
    %v578 = vadd.f32 %v576, %v577
    // While loop
    $region36: #{pt_map_loss_forward.1} parent=1 // loop_pre_header
      _
    $region37: #{pt_map_loss_forward.1} parent=1 // loop_header
      %v580 = vphi %v571, %v603
      %v581 = vphi 0.0, %v582
      %v582 = vphi %v578, %v610
      %s583 = sphi 0, %s611
      %p584 = scmp.lt.s32.totalorder %s583, 1000
      %v585 = vsub.f32 %v581, %v582
      %v586 = vand.u32 2147483647, %v585
      %v587 = vsel %vm281, %v586, -inf
      %588 = vmax.xlane.f32.xlu0 %v587
      %v589 = vpop.xlane.xlu0 %588
      %s590 = vtos %v589
      %p591 = scmp.gt.f32.partialorder %s590, 1e-06
      %p592 = pnand %p584, %p591
      %p593 = pneg %p592
    $region38: #{pt_map_loss_forward.1} parent=1 // loop_header_branch
      %595 = sbr.rel (%p592) target = $region42
    $region39: #{pt_map_loss_forward.1} parent=1 // loop_body
      %v596 = vrcp.pop %v582
      %v597 = vmul.f32 %v580, %v596
      %v598 = vsel %vm545, %v597, 0.0
      %599 = vadd.xlane.f32.xlu0 %v598
      %v600 = vpop.xlane.xlu0 %599
      %v601 = vrcp.pop %v600
      %v602 = vmul.f32 %v601, 3.0
      %v603 = vmul.f32 %v597, %v602
      %v604 = vsel %vm545, %v603, 0.0
      %v605 = vrot.slane %v604, 4
      %v606 = vadd.f32 %v604, %v605
      %v607 = vrot.slane %v606, 2
      %v608 = vadd.f32 %v606, %v607
      %v609 = vrot.slane %v608, 1
      %v610 = vadd.f32 %v608, %v609
      %s611 = sadd.s32 %s583, 1
    $region40: #{pt_map_loss_forward.1} parent=1 // loop_footer
      _
    $region41: #{pt_map_loss_forward.1} parent=1 // loop_footer_branch
      %579 = sbr.rel target = $region37
    $region42: #{pt_map_loss_forward.1} parent=1 // loop_exit
      _
    %v612 = vadd.f32 %v580, 1e-06
    %v613 = vlog2.pop %v612
    %v614 = vmul.f32 %v613, 0.6931472
    %615 = vst.msk [vmem:[#allocation6] sm:$0xf] %vm545, %v614
    %v616 = vsel %vm545, %v580, -inf
    %v617 = vrot.slane %v616, 4
    %v618 = vmax.f32 %v616, %v617
    %v619 = vrot.slane %v618, 2
    %v620 = vmax.f32 %v618, %v619
    %v621 = vrot.slane %v620, 1
    %v622 = vmax.f32 %v620, %v621
    %vm623 = vcmp.ge.f32.partialorder %v580, %v622
    %v624 = vsel %vm623, %v131, 4
    %v625 = vsel %vm545, %v624, 2147483647
    %v626 = vrot.slane %v625, 4
    %vm627 = vcmp.lt.s32.totalorder %v625, %v626
    %v628 = vsel %vm627, %v625, %v626
    %v629 = vrot.slane %v628, 2
    %vm630 = vcmp.lt.s32.totalorder %v628, %v629
    %v631 = vsel %vm630, %v628, %v629
    %v632 = vrot.slane %v631, 1
    %vm633 = vcmp.lt.s32.totalorder %v631, %v632
    %v634 = vsel %vm633, %v631, %v632
    %v635 = vld [vmem:[%s3] sm:$0x1]
    %vm636 = vcmp.eq.s32.totalorder %v634, %v635
    %v637 = vsel %vm636, 1, 0
    %v638 = vcvt.s32.f32 %v637
    %vm639 = vcmask 90112
    %v640 = vsel %vm639, %v638, 0.0
    %641 = vadd.xlane.f32.xlu0 %v640
    %v642 = vpop.xlane.xlu0 %641
    %v643 = vrot.slane %v642, 4
    %v644 = vadd.f32 %v642, %v643
    %v645 = vrot.slane %v644, 2
    %v646 = vadd.f32 %v644, %v645
    %v647 = vrot.slane %v646, 1
    %v648 = vadd.f32 %v646, %v647
    %s649 = vtos %v648
    %v650 = vrcp.pop 12.0
    %v651 = vmul.f32 12.0, %v650
    %v652 = vsub.f32 1.0, %v651
    %v653 = vmul.f32 %v650, %v652
    %v654 = vadd.f32 %v650, %v653
    %vm655 = vweird.f32 %v650
    %v656 = vsel %vm655, %v650, %v654
    %s657 = vtos %v656
    %s658 = smul.f32 %s649, %s657
    %s659 = scalar_lea.smem [#allocation7], 0
    %660 = sst [smem:[%s659]] %s658
    // Predicated region
    $region43: #{pt_map_loss_forward.1} parent=1 // pred_check
      _
    $region44: #{pt_map_loss_forward.1} parent=1 // pred_check_branch
      %662 = sbr.rel (0) target = $region46
    $region45: #{pt_map_loss_forward.1} parent=1 // pred_region
      %664 = vsyncadd [#allocation4], 0
      %s666 = sshll.u32 [#allocation6], 4
      %s667 = int_to_ptr.vmem [resolvable:$true] %s666
      %s668 = sshll.u32 %s4, 4
      %s669 = int_to_ptr.hbm [resolvable:$true] %s668
      %671 = dma.vmem_to_hbm [thread:$0]  %s667, 64, %s669, [#allocation4]
    $region46: #{pt_map_loss_forward.1} parent=1 // pred_fallthru
      _
    // Predicated region
    $region47: #{pt_map_loss_forward.1} parent=1 // pred_check
      _
    $region48: #{pt_map_loss_forward.1} parent=1 // pred_check_branch
      %673 = sbr.rel (0) target = $region50
    $region49: #{pt_map_loss_forward.1} parent=1 // pred_region
      %675 = vsyncadd [#allocation5], 0
      %s677 = sshll.u32 %s5, 4
      %s678 = int_to_ptr.hbm [resolvable:$true] %s677
      %680 = dma.smem_to_hbm [#allocation7], 16, %s678, [#allocation5]
    $region50: #{pt_map_loss_forward.1} parent=1 // pred_fallthru
      _
    // Predicated region
    $region51: #{pt_map_loss_forward.1} parent=1 // pred_check
      _
    $region52: #{pt_map_loss_forward.1} parent=1 // pred_check_branch
      %682 = sbr.rel (0) target = $region54
    $region53: #{pt_map_loss_forward.1} parent=1 // pred_region
      %684 = dma.done [#allocation4], 64
    $region54: #{pt_map_loss_forward.1} parent=1 // pred_fallthru
      _
    // Predicated region
    $region55: #{pt_map_loss_forward.1} parent=1 // pred_check
      _
    $region56: #{pt_map_loss_forward.1} parent=1 // pred_check_branch
      %686 = sbr.rel (0) target = $region58
    $region57: #{pt_map_loss_forward.1} parent=1 // pred_region
      %688 = dma.done [#allocation5], 16
    $region58: #{pt_map_loss_forward.1} parent=1 // pred_fallthru
      _
    %689 = sfence
    %690 = vsyncpa [#allocation3], 1
    %691 = vsyncpa [#allocation4], 1
    %692 = vsyncpa [#allocation5], 1

</llo_original>
